<compile_context>
chip_gen: v6e
topology: v6e:2x2x1
jax: 0.10.0
libtpu: 0.0.40
codegen_flags: <defaults>
</compile_context>

<pallas_src>
import functools

import jax
import jax.numpy as jnp
from jax.experimental import pallas as pl
from jax.experimental.pallas import tpu as pltpu

BN_EPS = 1e-5
NUM_CLASSES = 3
CLASS_PAD = 128          # lane-dense classifier output width
SUBLANE = 8
HID1 = 128               # GCNConv1 output width
HID2 = 64                # GCNConv2 / MLP hidden width


def _round_up(v, m):
    return ((v + m - 1) // m) * m


def _vmem_budget_bytes():
    """~3/4 of physical VMEM (64 MiB on v7x, 128 MiB on v5e/v6e); safe fallback."""
    try:
        cap = int(pltpu.get_tpu_info().vmem_capacity_bytes)
    except Exception:   # conservative fallback if the query is unavailable
        cap = 64 * 2**20
    return (cap * 3) // 4


# ---------------------------------------------------------------------------
# Kernels
# ---------------------------------------------------------------------------
def fused_gcn_pool_kernel(a_ref, x_ref, w1_ref, b1_ref, bn1_ref,
                          w2_ref, b2_ref, bn2_ref, pooled_ref):
    """Per-graph: BN(relu(GCN1)) -> BN(relu(GCN2)) -> global_add_pool.

    a_ref:  [1, T, T]  bf16   per-graph normalized adjacency (zero-padded)
    x_ref:  [1, T, F]  bf16   per-graph node features (zero-padded rows)
    pooled_ref: [1, 1, 64] f32
    """
    a = a_ref[0]                       # [T, T] bf16
    x = x_ref[0]                       # [T, F] bf16

    # GCNConv1 (F -> 128): propagate-then-transform (F < 128 => fewer MACs).
    ax = jnp.dot(a, x, preferred_element_type=jnp.float32).astype(jnp.bfloat16)
    h1 = jnp.dot(ax, w1_ref[...], preferred_element_type=jnp.float32)
    h1 = h1 + b1_ref[...]
    h1 = jnp.maximum(h1, 0.0)                              # ReLU (f32, VPU)
    h1 = h1 * bn1_ref[0:1, :] + bn1_ref[1:2, :]            # folded eval BN1

    # GCNConv2 (128 -> 64): transform-then-propagate, computed exactly once.
    t2 = jnp.dot(h1.astype(jnp.bfloat16), w2_ref[...],
                 preferred_element_type=jnp.float32)
    h2 = jnp.dot(a, t2.astype(jnp.bfloat16), preferred_element_type=jnp.float32)
    h2 = h2 + b2_ref[...]
    h2 = jnp.maximum(h2, 0.0)
    h2 = h2 * bn2_ref[0:1, :] + bn2_ref[1:2, :]            # folded eval BN2

    # global_add_pool over real nodes only.  Real rows have a positive A
    # row-sum (self loops guarantee deg >= 1); padded rows are all-zero, so
    # their relu(bias)*scale+shift garbage never reaches the pooled sum.
    row_sum = jnp.sum(a.astype(jnp.float32), axis=1, keepdims=True)   # [T, 1]
    valid = row_sum > 0.0
    pooled = jnp.sum(jnp.where(valid, h2, 0.0), axis=0, keepdims=True)  # [1, 64]
    pooled_ref[...] = pooled.reshape(pooled_ref.shape)


def mlp_head_kernel(pooled_ref, wf1_ref, bf1_ref, bn3_ref,
                    wf2_ref, bf2_ref, wf3_ref, bf3_ref,
                    out_ref, *, num_classes):
    """MLP head on pooled graph embeddings + masked lane-dense log_softmax."""
    pooled = pooled_ref[...]                                         # [G_pad, 64] f32

    z = jnp.dot(pooled.astype(jnp.bfloat16), wf1_ref[...],
                preferred_element_type=jnp.float32) + bf1_ref[...]
    z = jnp.maximum(z, 0.0)
    z = z * bn3_ref[0:1, :] + bn3_ref[1:2, :]                        # folded BN3

    z = jnp.dot(z.astype(jnp.bfloat16), wf2_ref[...],
                preferred_element_type=jnp.float32) + bf2_ref[...]
    z = jnp.maximum(z, 0.0)
    # dropout(p=0.2) is the identity in eval mode.

    logits = jnp.dot(z.astype(jnp.bfloat16), wf3_ref[...],
                     preferred_element_type=jnp.float32) + bf3_ref[...]  # [G_pad, 128]

    # masked log_softmax over the real classes only (columns [0, num_classes))
    col = jax.lax.broadcasted_iota(jnp.int32, logits.shape, 1)
    mask = col < num_classes
    logits = jnp.where(mask, logits, -1e30)
    m = jnp.max(logits, axis=1, keepdims=True)
    shifted = logits - m
    lse = jnp.log(jnp.sum(jnp.where(mask, jnp.exp(shifted), 0.0),
                          axis=1, keepdims=True))
    out_ref[...] = jnp.where(mask, shifted - lse, 0.0)


# ---------------------------------------------------------------------------
# Plain-JAX glue: block-diagonal graph densification (per-graph blocks only,
# never an N x N matrix) + eval-time parameter folding.
# ---------------------------------------------------------------------------
def build_graph_blocks(x, edge_index, batch_vec, num_graphs, max_nodes):
    """Per-graph D^-1/2 (A+I) D^-1/2 blocks + per-graph feature blocks.

    Matches torch_geometric gcn_norm for undirected / symmetric edge lists
    (block-diagonal => per-graph normalization == global normalization).
    Assumes PyG-style batching: nodes of each graph are contiguous.
    """
    n = x.shape[0]
    counts = jnp.zeros((num_graphs,), jnp.int32).at[batch_vec].add(1)
    offsets = jnp.cumsum(counts) - counts                     # exclusive cumsum
    local = jnp.arange(n, dtype=jnp.int32) - offsets[batch_vec]

    src, dst = edge_index[0], edge_index[1]
    g_e = batch_vec[dst]                                      # graph of each edge
    r = local[dst]
    c = local[src]

    adj = jnp.zeros((num_graphs, max_nodes, max_nodes), jnp.float32)
    adj = adj.at[g_e, r, c].add(1.0)                          # message src -> dst
    adj = adj.at[batch_vec, local, local].add(1.0)            # self loops
    deg = jnp.sum(adj, axis=2)
    dinv = jnp.where(deg > 0, jax.lax.rsqrt(deg), 0.0)
    a_blocks = dinv[:, :, None] * adj * dinv[:, None, :]

    xb = jnp.zeros((num_graphs, max_nodes, x.shape[1]), x.dtype)
    xb = xb.at[batch_vec, local].set(x)
    return a_blocks, xb


def _fold_bn(bn):
    """bn rows: gamma, beta, running_mean, running_var -> [2, C] scale/shift."""
    gamma, beta, mean, var = bn[0:1], bn[1:2], bn[2:3], bn[3:4]
    scale = gamma * jax.lax.rsqrt(var + BN_EPS)
    shift = beta - mean * scale
    return jnp.concatenate([scale, shift], axis=0)


# ---------------------------------------------------------------------------
# pallas_call wrappers
# ---------------------------------------------------------------------------
def _fused_gcn_pool(a_bf, x_bf, w1, b1, bn1, w2, b2, bn2):
    g, t, _ = a_bf.shape
    f_in = x_bf.shape[2]
    hid1 = w1.shape[1]
    hid2 = w2.shape[1]

    flops = 2 * g * (t * t * f_in + t * f_in * hid1
                     + t * hid1 * hid2 + t * t * hid2)
    bytes_accessed = (2 * (a_bf.size + x_bf.size + w1.size + w2.size)
                      + 4 * (b1.size + bn1.size + b2.size + bn2.size + g * hid2))
    # per-step working set (double-buffered per-graph streams + resident weights
    # + f32 intermediates); tiny for molecular graphs.
    working = (4 * (t * t + t * f_in)              # bf16, x2 buffers
               + 2 * (w1.size + w2.size)
               + 4 * (t * hid1 + t * hid2
                      + b1.size + bn1.size + b2.size + bn2.size))
    vmem_limit = int(min(_vmem_budget_bytes(), max(16 * 2**20, 8 * working)))

    return pl.pallas_call(
        fused_gcn_pool_kernel,
        out_shape=jax.ShapeDtypeStruct((g, 1, hid2), jnp.float32),
        grid=(g,),
        in_specs=[
            pl.BlockSpec((1, t, t), lambda i: (i, 0, 0)),      # A block (streamed)
            pl.BlockSpec((1, t, f_in), lambda i: (i, 0, 0)),   # X block (streamed)
            pl.BlockSpec((f_in, hid1), lambda i: (0, 0)),      # W1 (grid-invariant)
            pl.BlockSpec((1, hid1), lambda i: (0, 0)),         # b1
            pl.BlockSpec((2, hid1), lambda i: (0, 0)),         # folded BN1
            pl.BlockSpec((hid1, hid2), lambda i: (0, 0)),      # W2
            pl.BlockSpec((1, hid2), lambda i: (0, 0)),         # b2
            pl.BlockSpec((2, hid2), lambda i: (0, 0)),         # folded BN2
        ],
        out_specs=pl.BlockSpec((1, 1, hid2), lambda i: (i, 0, 0)),
        compiler_params=pltpu.CompilerParams(
            dimension_semantics=("parallel",),
            vmem_limit_bytes=vmem_limit,
        ),
        cost_estimate=pl.CostEstimate(
            flops=int(flops), transcendentals=0,
            bytes_accessed=int(bytes_accessed)),
    )(a_bf, x_bf, w1, b1, bn1, w2, b2, bn2)


def _mlp_head(pooled, wf1, bf1, bn3, wf2, bf2, wf3p, bf3p):
    g_pad = pooled.shape[0]
    flops = 2 * g_pad * (HID2 * HID2 + HID2 * HID2 + HID2 * CLASS_PAD)
    bytes_accessed = (4 * pooled.size
                      + 2 * (wf1.size + wf2.size + wf3p.size)
                      + 4 * (bf1.size + bn3.size + bf2.size + bf3p.size
                             + g_pad * CLASS_PAD))
    vmem_limit = int(min(_vmem_budget_bytes(), max(4 * 2**20, 8 * bytes_accessed)))
    vmem = pl.BlockSpec(memory_space=pltpu.MemorySpace.VMEM)
    return pl.pallas_call(
        functools.partial(mlp_head_kernel, num_classes=NUM_CLASSES),
        out_shape=jax.ShapeDtypeStruct((g_pad, CLASS_PAD), jnp.float32),
        in_specs=[vmem] * 8,
        out_specs=vmem,
        compiler_params=pltpu.CompilerParams(vmem_limit_bytes=vmem_limit),
        cost_estimate=pl.CostEstimate(
            flops=int(flops), transcendentals=int(g_pad * CLASS_PAD),
            bytes_accessed=int(bytes_accessed)),
    )(pooled, wf1, bf1, bn3, wf2, bf2, wf3p, bf3p)


# ---------------------------------------------------------------------------
# Parameters & forward
# ---------------------------------------------------------------------------
def init_params(key, num_features):
    ks = jax.random.split(key, 8)

    def dense(k, fan_in, fan_out):
        scale = 1.0 / jnp.sqrt(jnp.float32(fan_in))
        w = jax.random.uniform(k, (fan_in, fan_out), jnp.float32, -scale, scale)
        b = jnp.zeros((1, fan_out), jnp.float32) + 0.01
        return w, b

    def bn(k, c):
        g = 1.0 + 0.1 * jax.random.normal(k, (1, c), jnp.float32)
        beta = 0.05 * jnp.ones((1, c), jnp.float32)
        mean = 0.02 * jnp.ones((1, c), jnp.float32)
        var = jnp.ones((1, c), jnp.float32) * 0.9
        return jnp.concatenate([g, beta, mean, var], axis=0)   # [4, c]

    w1, b1 = dense(ks[0], num_features, HID1)
    w2, b2 = dense(ks[1], HID1, HID2)
    wf1, bf1 = dense(ks[2], HID2, HID2)
    wf2, bf2 = dense(ks[3], HID2, HID2)
    wf3, bf3 = dense(ks[4], HID2, NUM_CLASSES)
    return dict(w1=w1, b1=b1, bn1=bn(ks[5], HID1),
                w2=w2, b2=b2, bn2=bn(ks[6], HID2),
                wf1=wf1, bf1=bf1, bn3=bn(ks[7], HID2),
                wf2=wf2, bf2=bf2, wf3=wf3, bf3=bf3)


@functools.partial(jax.jit, static_argnames=("num_graphs", "max_nodes_per_graph"))
def solubility_forward(x, edge_index, batch_vec, params,
                       num_graphs, max_nodes_per_graph):
    # Per-graph block size: only sublane-align (blocks are tiny; the lane dim
    # is padded internally by the compiler, no need to waste HBM bytes on 128).
    t = _round_up(max(int(max_nodes_per_graph), SUBLANE), SUBLANE)
    g_pad = _round_up(num_graphs, SUBLANE)

    # Block-diagonal densification: per-graph [T, T] blocks, never N x N.
    a_blocks, x_blocks = build_graph_blocks(x, edge_index, batch_vec,
                                            num_graphs, t)
    a_bf = a_blocks.astype(jnp.bfloat16)
    x_bf = x_blocks.astype(jnp.bfloat16)

    # Eval-time folding / casting of parameters.
    bn1 = _fold_bn(params["bn1"])
    bn2 = _fold_bn(params["bn2"])
    bn3 = _fold_bn(params["bn3"])
    w1 = params["w1"].astype(jnp.bfloat16)
    w2 = params["w2"].astype(jnp.bfloat16)
    wf1 = params["wf1"].astype(jnp.bfloat16)
    wf2 = params["wf2"].astype(jnp.bfloat16)
    wf3p = jnp.pad(params["wf3"],
                   ((0, 0), (0, CLASS_PAD - NUM_CLASSES))).astype(jnp.bfloat16)
    bf3p = jnp.pad(params["bf3"], ((0, 0), (0, CLASS_PAD - NUM_CLASSES)))

    # Fused GCNConv1 -> GCNConv2 -> global_add_pool, one grid step per graph.
    pooled = _fused_gcn_pool(a_bf, x_bf,
                             w1, params["b1"], bn1,
                             w2, params["b2"], bn2)          # [G, 1, 64] f32
    pooled = pooled.reshape(num_graphs, HID2)
    pooled = jnp.pad(pooled, ((0, g_pad - num_graphs), (0, 0)))

    out_pad = _mlp_head(pooled, wf1, params["bf1"], bn3,
                        wf2, params["bf2"], wf3p, bf3p)      # [G_pad, 128]
    return out_pad[:num_graphs, :NUM_CLASSES]


if __name__ == "__main__":
    key = jax.random.PRNGKey(0)
    k_x, k_p = jax.random.split(key)

    num_features = 32
    num_nodes = 8        # two graphs of 4 nodes each
    num_graphs = 2

    # node features
    x = jax.random.normal(k_x, (num_nodes, num_features), jnp.float32)

    # deterministic symmetric edges: two 4-node chains (both directions)
    src = jnp.array([0, 1, 1, 2, 2, 3, 4, 5, 5, 6, 6, 7], jnp.int32)
    dst = jnp.array([1, 0, 2, 1, 3, 2, 5, 4, 6, 5, 7, 6], jnp.int32)
    edge_index = jnp.stack([src, dst], axis=0)          # [2, E]

    # graph assignment vector (like batch.batch, PyG contiguous convention)
    batch_vec = jnp.array([0, 0, 0, 0, 1, 1, 1, 1], jnp.int32)

    params = init_params(k_p, num_features)

    # static per-batch shape info (in a real pipeline, known on the host)
    max_nodes_per_graph = 4

    out = solubility_forward(x, edge_index, batch_vec, params,
                             num_graphs, max_nodes_per_graph)
    out = jax.block_until_ready(out)

    assert out.shape == (num_graphs, 3)
    assert bool(jnp.all(jnp.isfinite(out)))
    # log_softmax rows must exp-sum to 1
    assert bool(jnp.allclose(jnp.sum(jnp.exp(out), axis=1), 1.0, atol=1e-5))
    print("KERNEL_OK")
</pallas_src>

<mosaic_0001>
module attributes {stable_mosaic.version = 11 : i64} {
  func.func private @main(%arg0: i32) attributes {dimension_semantics = [#tpu.dimension_semantics<core_parallel>], iteration_bounds = array<i64: 2>, tpu.core_type = #tpu.core_type<sc_scalar_subcore>, window_params = []} {
    return
  }
}

module attributes {stable_mosaic.version = 11 : i64} {
  func.func private @main(%arg0: i32) attributes {dimension_semantics = [#tpu.dimension_semantics<core_parallel>], iteration_bounds = array<i64: 2>, tpu.core_type = #tpu.core_type<sc_scalar_subcore>, window_params = []} {
    return
  }
}

module attributes {stable_mosaic.version = 11 : i64} {
  func.func @fused_gcn_pool_kernel(%arg0: i32, %arg1: memref<1x8x8xbf16, #tpu.memory_space<vmem>>, %arg2: memref<1x8x32xbf16, #tpu.memory_space<vmem>>, %arg3: memref<32x128xbf16, #tpu.memory_space<vmem>>, %arg4: memref<1x128xf32, #tpu.memory_space<vmem>>, %arg5: memref<2x128xf32, #tpu.memory_space<vmem>>, %arg6: memref<128x64xbf16, #tpu.memory_space<vmem>>, %arg7: memref<1x64xf32, #tpu.memory_space<vmem>>, %arg8: memref<2x64xf32, #tpu.memory_space<vmem>>, %arg9: memref<1x1x64xf32, #tpu.memory_space<vmem>>) attributes {dimension_semantics = [#tpu.dimension_semantics<parallel>], iteration_bounds = array<i64: 2>, scalar_prefetch = 0 : i64, scratch_operands = 0 : i64, tpu.core_type = #tpu.core_type<tc>, window_params = [{transform_indices = @transform_0, window_bounds = array<i64: 1, 8, 8>}, {transform_indices = @transform_1, window_bounds = array<i64: 1, 8, 32>}, {pipeline_mode = #tpu.pipeline_mode<synchronous>, transform_indices = @transform_2, window_bounds = array<i64: 32, 128>}, {pipeline_mode = #tpu.pipeline_mode<synchronous>, transform_indices = @transform_3, window_bounds = array<i64: 1, 128>}, {pipeline_mode = #tpu.pipeline_mode<synchronous>, transform_indices = @transform_4, window_bounds = array<i64: 2, 128>}, {pipeline_mode = #tpu.pipeline_mode<synchronous>, transform_indices = @transform_5, window_bounds = array<i64: 128, 64>}, {pipeline_mode = #tpu.pipeline_mode<synchronous>, transform_indices = @transform_6, window_bounds = array<i64: 1, 64>}, {pipeline_mode = #tpu.pipeline_mode<synchronous>, transform_indices = @transform_7, window_bounds = array<i64: 2, 64>}, {transform_indices = @transform_8, window_bounds = array<i64: 1, 1, 64>}]} {
    %c0 = arith.constant 0 : index
    %c0_0 = arith.constant 0 : index
    %c0_1 = arith.constant 0 : index
    %0 = vector.load %arg1[%c0, %c0_0, %c0_1] : memref<1x8x8xbf16, #tpu.memory_space<vmem>>, vector<1x8x8xbf16>
    %1 = vector.shape_cast %0 : vector<1x8x8xbf16> to vector<8x8xbf16>
    %c0_2 = arith.constant 0 : index
    %c0_3 = arith.constant 0 : index
    %c0_4 = arith.constant 0 : index
    %2 = vector.load %arg2[%c0_2, %c0_3, %c0_4] : memref<1x8x32xbf16, #tpu.memory_space<vmem>>, vector<1x8x32xbf16>
    %3 = vector.shape_cast %2 : vector<1x8x32xbf16> to vector<8x32xbf16>
    %cst = arith.constant dense<0.000000e+00> : vector<8x32xf32>
    %4 = tpu.matmul %1, %3, %cst {dimension_numbers = #tpu.dot_dimension_numbers<[1], [0], [0], [1], [0, 0, 1, 1], [], []>} : vector<8x8xbf16>, vector<8x32xbf16>, vector<8x32xf32> -> vector<8x32xf32>
    %5 = arith.truncf %4 : vector<8x32xf32> to vector<8x32xbf16>
    %c0_5 = arith.constant 0 : index
    %c0_6 = arith.constant 0 : index
    %6 = vector.load %arg3[%c0_5, %c0_6] : memref<32x128xbf16, #tpu.memory_space<vmem>>, vector<32x128xbf16>
    %cst_7 = arith.constant dense<0.000000e+00> : vector<8x128xf32>
    %7 = tpu.matmul %5, %6, %cst_7 {dimension_numbers = #tpu.dot_dimension_numbers<[1], [0], [0], [1], [0, 0, 1, 1], [], []>} : vector<8x32xbf16>, vector<32x128xbf16>, vector<8x128xf32> -> vector<8x128xf32>
    %c0_8 = arith.constant 0 : index
    %c0_9 = arith.constant 0 : index
    %8 = vector.load %arg4[%c0_8, %c0_9] : memref<1x128xf32, #tpu.memory_space<vmem>>, vector<1x128xf32>
    %9 = vector.broadcast %8 : vector<1x128xf32> to vector<8x128xf32>
    %10 = arith.addf %7, %9 : vector<8x128xf32>
    %cst_10 = arith.constant 0.000000e+00 : f32
    %11 = vector.broadcast %cst_10 : f32 to vector<8x128xf32>
    %12 = arith.maximumf %10, %11 : vector<8x128xf32>
    %c0_11 = arith.constant 0 : index
    %c0_12 = arith.constant 0 : index
    %13 = vector.load %arg5[%c0_11, %c0_12] : memref<2x128xf32, #tpu.memory_space<vmem>>, vector<1x128xf32>
    %14 = vector.broadcast %13 : vector<1x128xf32> to vector<8x128xf32>
    %15 = arith.mulf %12, %14 : vector<8x128xf32>
    %c1 = arith.constant 1 : index
    %c0_13 = arith.constant 0 : index
    %16 = vector.load %arg5[%c1, %c0_13] : memref<2x128xf32, #tpu.memory_space<vmem>>, vector<1x128xf32>
    %17 = vector.broadcast %16 : vector<1x128xf32> to vector<8x128xf32>
    %18 = arith.addf %15, %17 : vector<8x128xf32>
    %19 = arith.truncf %18 : vector<8x128xf32> to vector<8x128xbf16>
    %c0_14 = arith.constant 0 : index
    %c0_15 = arith.constant 0 : index
    %20 = vector.load %arg6[%c0_14, %c0_15] : memref<128x64xbf16, #tpu.memory_space<vmem>>, vector<128x64xbf16>
    %cst_16 = arith.constant dense<0.000000e+00> : vector<8x64xf32>
    %21 = tpu.matmul %19, %20, %cst_16 {dimension_numbers = #tpu.dot_dimension_numbers<[1], [0], [0], [1], [0, 0, 1, 1], [], []>} : vector<8x128xbf16>, vector<128x64xbf16>, vector<8x64xf32> -> vector<8x64xf32>
    %22 = arith.truncf %21 : vector<8x64xf32> to vector<8x64xbf16>
    %cst_17 = arith.constant dense<0.000000e+00> : vector<8x64xf32>
    %23 = tpu.matmul %1, %22, %cst_17 {dimension_numbers = #tpu.dot_dimension_numbers<[1], [0], [0], [1], [0, 0, 1, 1], [], []>} : vector<8x8xbf16>, vector<8x64xbf16>, vector<8x64xf32> -> vector<8x64xf32>
    %c0_18 = arith.constant 0 : index
    %c0_19 = arith.constant 0 : index
    %24 = vector.load %arg7[%c0_18, %c0_19] : memref<1x64xf32, #tpu.memory_space<vmem>>, vector<1x64xf32>
    %25 = vector.broadcast %24 : vector<1x64xf32> to vector<8x64xf32>
    %26 = arith.addf %23, %25 : vector<8x64xf32>
    %cst_20 = arith.constant 0.000000e+00 : f32
    %27 = vector.broadcast %cst_20 : f32 to vector<8x64xf32>
    %28 = arith.maximumf %26, %27 : vector<8x64xf32>
    %c0_21 = arith.constant 0 : index
    %c0_22 = arith.constant 0 : index
    %29 = vector.load %arg8[%c0_21, %c0_22] : memref<2x64xf32, #tpu.memory_space<vmem>>, vector<1x64xf32>
    %30 = vector.broadcast %29 : vector<1x64xf32> to vector<8x64xf32>
    %31 = arith.mulf %28, %30 : vector<8x64xf32>
    %c1_23 = arith.constant 1 : index
    %c0_24 = arith.constant 0 : index
    %32 = vector.load %arg8[%c1_23, %c0_24] : memref<2x64xf32, #tpu.memory_space<vmem>>, vector<1x64xf32>
    %33 = vector.broadcast %32 : vector<1x64xf32> to vector<8x64xf32>
    %34 = arith.addf %31, %33 : vector<8x64xf32>
    %35 = arith.extf %1 : vector<8x8xbf16> to vector<8x8xf32>
    %cst_25 = arith.constant dense<0.000000e+00> : vector<8xf32>
    %36 = vector.multi_reduction <add>, %35, %cst_25 [1] : vector<8x8xf32> to vector<8xf32>
    %37 = vector.shape_cast %36 : vector<8xf32> to vector<8x1xf32>
    %cst_26 = arith.constant 0.000000e+00 : f32
    %38 = vector.broadcast %cst_26 : f32 to vector<8x1xf32>
    %39 = arith.cmpf ogt, %37, %38 : vector<8x1xf32>
    %cst_27 = arith.constant 0.000000e+00 : f32
    %40 = vector.shape_cast %39 : vector<8x1xi1> to vector<8x1xi1>
    %41 = vector.broadcast %40 : vector<8x1xi1> to vector<8x64xi1>
    %42 = vector.broadcast %cst_27 : f32 to vector<8x64xf32>
    %43 = arith.select %41, %34, %42 : vector<8x64xi1>, vector<8x64xf32>
    %cst_28 = arith.constant dense<0.000000e+00> : vector<64xf32>
    %44 = vector.multi_reduction <add>, %43, %cst_28 [0] : vector<8x64xf32> to vector<64xf32>
    %45 = vector.shape_cast %44 : vector<64xf32> to vector<1x64xf32>
    %46 = vector.shape_cast %45 : vector<1x64xf32> to vector<1x1x64xf32>
    %c0_29 = arith.constant 0 : index
    %c0_30 = arith.constant 0 : index
    %c0_31 = arith.constant 0 : index
    %47 = vector.load %arg9[%c0_29, %c0_30, %c0_31] : memref<1x1x64xf32, #tpu.memory_space<vmem>>, vector<1x1x64xf32>
    tpu.vector_store %arg9[%c0_29, %c0_30, %c0_31], %46 {strides = array<i32>} : memref<1x1x64xf32, #tpu.memory_space<vmem>>, vector<1x1x64xf32>,
    return
  }
  func.func @transform_0(%arg0: i32) -> (i32, i32, i32) {
    %c0_i32 = arith.constant 0 : i32
    %c0_i32_0 = arith.constant 0 : i32
    %c0_i32_1 = arith.constant 0 : i32
    return %arg0, %c0_i32, %c0_i32_0 : i32, i32, i32
  }
  func.func @transform_1(%arg0: i32) -> (i32, i32, i32) {
    %c0_i32 = arith.constant 0 : i32
    %c0_i32_0 = arith.constant 0 : i32
    %c0_i32_1 = arith.constant 0 : i32
    return %arg0, %c0_i32, %c0_i32_0 : i32, i32, i32
  }
  func.func @transform_2(%arg0: i32) -> (i32, i32) {
    %c0_i32 = arith.constant 0 : i32
    %c0_i32_0 = arith.constant 0 : i32
    %c0_i32_1 = arith.constant 0 : i32
    return %c0_i32, %c0_i32_0 : i32, i32
  }
  func.func @transform_3(%arg0: i32) -> (i32, i32) {
    %c0_i32 = arith.constant 0 : i32
    %c0_i32_0 = arith.constant 0 : i32
    %c0_i32_1 = arith.constant 0 : i32
    return %c0_i32, %c0_i32_0 : i32, i32
  }
  func.func @transform_4(%arg0: i32) -> (i32, i32) {
    %c0_i32 = arith.constant 0 : i32
    %c0_i32_0 = arith.constant 0 : i32
    %c0_i32_1 = arith.constant 0 : i32
    return %c0_i32, %c0_i32_0 : i32, i32
  }
  func.func @transform_5(%arg0: i32) -> (i32, i32) {
    %c0_i32 = arith.constant 0 : i32
    %c0_i32_0 = arith.constant 0 : i32
    %c0_i32_1 = arith.constant 0 : i32
    return %c0_i32, %c0_i32_0 : i32, i32
  }
  func.func @transform_6(%arg0: i32) -> (i32, i32) {
    %c0_i32 = arith.constant 0 : i32
    %c0_i32_0 = arith.constant 0 : i32
    %c0_i32_1 = arith.constant 0 : i32
    return %c0_i32, %c0_i32_0 : i32, i32
  }
  func.func @transform_7(%arg0: i32) -> (i32, i32) {
    %c0_i32 = arith.constant 0 : i32
    %c0_i32_0 = arith.constant 0 : i32
    %c0_i32_1 = arith.constant 0 : i32
    return %c0_i32, %c0_i32_0 : i32, i32
  }
  func.func @transform_8(%arg0: i32) -> (i32, i32, i32) {
    %c0_i32 = arith.constant 0 : i32
    %c0_i32_0 = arith.constant 0 : i32
    %c0_i32_1 = arith.constant 0 : i32
    return %arg0, %c0_i32, %c0_i32_0 : i32, i32, i32
  }
}

module attributes {stable_mosaic.version = 11 : i64} {
  func.func @mlp_head_kernel(%arg0: memref<8x64xf32, #tpu.memory_space<vmem>>, %arg1: memref<64x64xbf16, #tpu.memory_space<vmem>>, %arg2: memref<1x64xf32, #tpu.memory_space<vmem>>, %arg3: memref<2x64xf32, #tpu.memory_space<vmem>>, %arg4: memref<64x64xbf16, #tpu.memory_space<vmem>>, %arg5: memref<1x64xf32, #tpu.memory_space<vmem>>, %arg6: memref<64x128xbf16, #tpu.memory_space<vmem>>, %arg7: memref<1x128xf32, #tpu.memory_space<vmem>>, %arg8: memref<8x128xf32, #tpu.memory_space<vmem>>) attributes {dimension_semantics = [], scalar_prefetch = 0 : i64, scratch_operands = 0 : i64, tpu.core_type = #tpu.core_type<tc>} {
    %c0 = arith.constant 0 : index
    %c0_0 = arith.constant 0 : index
    %0 = vector.load %arg0[%c0, %c0_0] : memref<8x64xf32, #tpu.memory_space<vmem>>, vector<8x64xf32>
    %1 = arith.truncf %0 : vector<8x64xf32> to vector<8x64xbf16>
    %c0_1 = arith.constant 0 : index
    %c0_2 = arith.constant 0 : index
    %2 = vector.load %arg1[%c0_1, %c0_2] : memref<64x64xbf16, #tpu.memory_space<vmem>>, vector<64x64xbf16>
    %cst = arith.constant dense<0.000000e+00> : vector<8x64xf32>
    %3 = tpu.matmul %1, %2, %cst {dimension_numbers = #tpu.dot_dimension_numbers<[1], [0], [0], [1], [0, 0, 1, 1], [], []>} : vector<8x64xbf16>, vector<64x64xbf16>, vector<8x64xf32> -> vector<8x64xf32>
    %c0_3 = arith.constant 0 : index
    %c0_4 = arith.constant 0 : index
    %4 = vector.load %arg2[%c0_3, %c0_4] : memref<1x64xf32, #tpu.memory_space<vmem>>, vector<1x64xf32>
    %5 = vector.broadcast %4 : vector<1x64xf32> to vector<8x64xf32>
    %6 = arith.addf %3, %5 : vector<8x64xf32>
    %cst_5 = arith.constant 0.000000e+00 : f32
    %7 = vector.broadcast %cst_5 : f32 to vector<8x64xf32>
    %8 = arith.maximumf %6, %7 : vector<8x64xf32>
    %c0_6 = arith.constant 0 : index
    %c0_7 = arith.constant 0 : index
    %9 = vector.load %arg3[%c0_6, %c0_7] : memref<2x64xf32, #tpu.memory_space<vmem>>, vector<1x64xf32>
    %10 = vector.broadcast %9 : vector<1x64xf32> to vector<8x64xf32>
    %11 = arith.mulf %8, %10 : vector<8x64xf32>
    %c1 = arith.constant 1 : index
    %c0_8 = arith.constant 0 : index
    %12 = vector.load %arg3[%c1, %c0_8] : memref<2x64xf32, #tpu.memory_space<vmem>>, vector<1x64xf32>
    %13 = vector.broadcast %12 : vector<1x64xf32> to vector<8x64xf32>
    %14 = arith.addf %11, %13 : vector<8x64xf32>
    %15 = arith.truncf %14 : vector<8x64xf32> to vector<8x64xbf16>
    %c0_9 = arith.constant 0 : index
    %c0_10 = arith.constant 0 : index
    %16 = vector.load %arg4[%c0_9, %c0_10] : memref<64x64xbf16, #tpu.memory_space<vmem>>, vector<64x64xbf16>
    %cst_11 = arith.constant dense<0.000000e+00> : vector<8x64xf32>
    %17 = tpu.matmul %15, %16, %cst_11 {dimension_numbers = #tpu.dot_dimension_numbers<[1], [0], [0], [1], [0, 0, 1, 1], [], []>} : vector<8x64xbf16>, vector<64x64xbf16>, vector<8x64xf32> -> vector<8x64xf32>
    %c0_12 = arith.constant 0 : index
    %c0_13 = arith.constant 0 : index
    %18 = vector.load %arg5[%c0_12, %c0_13] : memref<1x64xf32, #tpu.memory_space<vmem>>, vector<1x64xf32>
    %19 = vector.broadcast %18 : vector<1x64xf32> to vector<8x64xf32>
    %20 = arith.addf %17, %19 : vector<8x64xf32>
    %cst_14 = arith.constant 0.000000e+00 : f32
    %21 = vector.broadcast %cst_14 : f32 to vector<8x64xf32>
    %22 = arith.maximumf %20, %21 : vector<8x64xf32>
    %23 = arith.truncf %22 : vector<8x64xf32> to vector<8x64xbf16>
    %c0_15 = arith.constant 0 : index
    %c0_16 = arith.constant 0 : index
    %24 = vector.load %arg6[%c0_15, %c0_16] : memref<64x128xbf16, #tpu.memory_space<vmem>>, vector<64x128xbf16>
    %cst_17 = arith.constant dense<0.000000e+00> : vector<8x128xf32>
    %25 = tpu.matmul %23, %24, %cst_17 {dimension_numbers = #tpu.dot_dimension_numbers<[1], [0], [0], [1], [0, 0, 1, 1], [], []>} : vector<8x64xbf16>, vector<64x128xbf16>, vector<8x128xf32> -> vector<8x128xf32>
    %c0_18 = arith.constant 0 : index
    %c0_19 = arith.constant 0 : index
    %26 = vector.load %arg7[%c0_18, %c0_19] : memref<1x128xf32, #tpu.memory_space<vmem>>, vector<1x128xf32>
    %27 = vector.broadcast %26 : vector<1x128xf32> to vector<8x128xf32>
    %28 = arith.addf %25, %27 : vector<8x128xf32>
    %29 = tpu.iota {dimensions = array<i32: 1>} : vector<8x128xi32>
    %c3_i32 = arith.constant 3 : i32
    %30 = vector.broadcast %c3_i32 : i32 to vector<8x128xi32>
    %31 = arith.cmpi slt, %29, %30 : vector<8x128xi32>
    %cst_20 = arith.constant -1.000000e+30 : f32
    %32 = vector.broadcast %cst_20 : f32 to vector<8x128xf32>
    %33 = arith.select %31, %28, %32 : vector<8x128xi1>, vector<8x128xf32>
    %cst_21 = arith.constant dense<0xFF800000> : vector<8xf32>
    %34 = vector.multi_reduction <maximumf>, %33, %cst_21 [1] : vector<8x128xf32> to vector<8xf32>
    %35 = vector.shape_cast %34 : vector<8xf32> to vector<8x1xf32>
    %36 = vector.broadcast %35 : vector<8x1xf32> to vector<8x128xf32>
    %37 = arith.subf %33, %36 : vector<8x128xf32>
    %38 = math.exp %37 : vector<8x128xf32>
    %cst_22 = arith.constant 0.000000e+00 : f32
    %39 = vector.broadcast %cst_22 : f32 to vector<8x128xf32>
    %40 = arith.select %31, %38, %39 : vector<8x128xi1>, vector<8x128xf32>
    %cst_23 = arith.constant dense<0.000000e+00> : vector<8xf32>
    %41 = vector.multi_reduction <add>, %40, %cst_23 [1] : vector<8x128xf32> to vector<8xf32>
    %42 = vector.shape_cast %41 : vector<8xf32> to vector<8x1xf32>
    %43 = math.log %42 : vector<8x1xf32>
    %44 = vector.broadcast %43 : vector<8x1xf32> to vector<8x128xf32>
    %45 = arith.subf %37, %44 : vector<8x128xf32>
    %cst_24 = arith.constant 0.000000e+00 : f32
    %46 = vector.broadcast %cst_24 : f32 to vector<8x128xf32>
    %47 = arith.select %31, %45, %46 : vector<8x128xi1>, vector<8x128xf32>
    %c0_25 = arith.constant 0 : index
    %c0_26 = arith.constant 0 : index
    %48 = vector.load %arg8[%c0_25, %c0_26] : memref<8x128xf32, #tpu.memory_space<vmem>>, vector<8x128xf32>
    tpu.vector_store %arg8[%c0_25, %c0_26], %47 {strides = array<i32>} : memref<8x128xf32, #tpu.memory_space<vmem>>, vector<8x128xf32>,
    return
  }
}

</mosaic_0001>

<llo_original>
// kernel: solubility_forward.3
$region0: #{solubility_forward.3}
  #allocation0 [shape = 'u32[]', space=smem, size = 0x4, offset = 0x4, fixed_abs, tag = 'smem constant byte address 0x4 - core index']
  #allocation1 [shape = 'u32[144,128]{1,0:T(1,128)}', space=vmem, size = 0x12000, scoped, tag = 'internal scratch']
  %s0 = inlined_call_operand.vmem [shape: f32[8,64], index: 0, kind: input, shape index: {}]
  %s1 = inlined_call_operand.vmem [shape: bf16[64,64], index: 1, kind: input, shape index: {}]
  %s2 = inlined_call_operand.vmem [shape: f32[1,64], index: 2, kind: input, shape index: {}]
  %s3 = inlined_call_operand.vmem [shape: f32[2,64], index: 3, kind: input, shape index: {}]
  %s4 = inlined_call_operand.vmem [shape: bf16[64,64], index: 4, kind: input, shape index: {}]
  %s5 = inlined_call_operand.vmem [shape: f32[1,64], index: 5, kind: input, shape index: {}]
  %s6 = inlined_call_operand.vmem [shape: bf16[64,128], index: 6, kind: input, shape index: {}]
  %s7 = inlined_call_operand.vmem [shape: f32[1,128], index: 7, kind: input, shape index: {}]
  %s8 = inlined_call_operand.vmem [shape: f32[8,128], index: 8, kind: output, shape index: {}]
  %s9 = sld [smem:[#allocation0]]
  $region42: #{solubility_forward.3} parent=0
    _
  %s11 = ssub.s32 1, %s9
  %s12 = scalar_select 0, %s11, %s9
  // Predicated region
  $region2: #{solubility_forward.3} parent=0 // pred_check
    _
  $region3: #{solubility_forward.3} parent=0 // pred_check_branch
    %14 = sbr.rel (0) target = $region5
  $region4: #{solubility_forward.3} parent=0 // pred_region
    _
  $region5: #{solubility_forward.3} parent=0 // pred_fallthru
    _
  // Predicated region
  $region6: #{solubility_forward.3} parent=0 // pred_check
    _
  $region7: #{solubility_forward.3} parent=0 // pred_check_branch
    %16 = sbr.rel (0) target = $region9
  $region8: #{solubility_forward.3} parent=0 // pred_region
    _
  $region9: #{solubility_forward.3} parent=0 // pred_fallthru
    _
  // Predicated region
  $region10: #{solubility_forward.3} parent=0 // pred_check
    _
  $region11: #{solubility_forward.3} parent=0 // pred_check_branch
    %18 = sbr.rel (0) target = $region13
  $region12: #{solubility_forward.3} parent=0 // pred_region
    _
  $region13: #{solubility_forward.3} parent=0 // pred_fallthru
    _
  // Predicated region
  $region14: #{solubility_forward.3} parent=0 // pred_check
    _
  $region15: #{solubility_forward.3} parent=0 // pred_check_branch
    %20 = sbr.rel (0) target = $region17
  $region16: #{solubility_forward.3} parent=0 // pred_region
    _
  $region17: #{solubility_forward.3} parent=0 // pred_fallthru
    _
  // Predicated region
  $region18: #{solubility_forward.3} parent=0 // pred_check
    _
  $region19: #{solubility_forward.3} parent=0 // pred_check_branch
    %22 = sbr.rel (0) target = $region21
  $region20: #{solubility_forward.3} parent=0 // pred_region
    _
  $region21: #{solubility_forward.3} parent=0 // pred_fallthru
    _
  // Predicated region
  $region22: #{solubility_forward.3} parent=0 // pred_check
    _
  $region23: #{solubility_forward.3} parent=0 // pred_check_branch
    %24 = sbr.rel (0) target = $region25
  $region24: #{solubility_forward.3} parent=0 // pred_region
    _
  $region25: #{solubility_forward.3} parent=0 // pred_fallthru
    _
  // Predicated region
  $region26: #{solubility_forward.3} parent=0 // pred_check
    _
  $region27: #{solubility_forward.3} parent=0 // pred_check_branch
    %26 = sbr.rel (0) target = $region29
  $region28: #{solubility_forward.3} parent=0 // pred_region
    _
  $region29: #{solubility_forward.3} parent=0 // pred_fallthru
    _
  // Predicated region
  $region30: #{solubility_forward.3} parent=0 // pred_check
    _
  $region31: #{solubility_forward.3} parent=0 // pred_check_branch
    %28 = sbr.rel (0) target = $region33
  $region32: #{solubility_forward.3} parent=0 // pred_region
    _
  $region33: #{solubility_forward.3} parent=0 // pred_fallthru
    _
  %v30 = vld [vmem:[%s0] sm:$0xff]
  %v31 = vpack.c.bf16 %v30, %v30
  %v32 = vld [vmem:[%s1] sm:$0xf]
  %v33 = vld [vmem:[%s1 + $0x4] sm:$0xf]
  %v34 = vld [vmem:[%s1 + $0x8] sm:$0xf]
  %v35 = vld [vmem:[%s1 + $0xc] sm:$0xf]
  %v36 = vld [vmem:[%s1 + $0x10] sm:$0xf]
  %v37 = vld [vmem:[%s1 + $0x14] sm:$0xf]
  %v38 = vld [vmem:[%s1 + $0x18] sm:$0xf]
  %v39 = vld [vmem:[%s1 + $0x1c] sm:$0xf]
  %v40 = vld [vmem:[%s2] sm:$0x1]
  %v42 = vlaneseq
  %v43 = vshrl.u32 %v42, 7
  %v44 = vsub.s32 0, %v43
  %v45 = vrot.slane %v40, %v44
  %v55 = vunpack.c.l.b16 %v32
  %v56 = vunpack.c.l.b16 %v33
  %v57 = vunpack.c.l.b16 %v34
  %v58 = vunpack.c.l.b16 %v35
  %v59 = vunpack.c.l.b16 %v36
  %v60 = vunpack.c.l.b16 %v37
  %v61 = vunpack.c.l.b16 %v38
  %v62 = vunpack.c.l.b16 %v39
  %v63 = vpack.c.b16 %v56, %v55
  %v64 = vpack.c.b16 %v58, %v57
  %v65 = vpack.c.b16 %v60, %v59
  %v66 = vpack.c.b16 %v62, %v61
  %vm71 = vcmask 523264
  %v73 = vsel %vm71, %v31, 0
  %75 = vmatprep.subr.bf16.mxu0 0
  %76 = vmatpush1.bf16.msra.mxu0 0
  %77 = vmatprep.subr.bf16.mxu0 0
  %78 = vmatpush1.bf16.msra.mxu0 0
  %79 = vmatprep.subr.bf16.mxu0 0
  %80 = vmatpush1.bf16.msra.mxu0 0
  %81 = vmatprep.subr.bf16.mxu0 0
  %82 = vmatpush1.bf16.msra.mxu0 0
  %83 = vmatprep.subr.bf16.mxu0 0
  %84 = vmatpush1.bf16.msra.mxu0 %v66
  %85 = vmatprep.subr.bf16.mxu0 0
  %86 = vmatpush1.bf16.msra.mxu0 %v65
  %87 = vmatprep.subr.bf16.mxu0 0
  %88 = vmatpush1.bf16.msra.mxu0 %v64
  %89 = vmatprep.subr.bf16.mxu0 0
  %90 = vmatpush1.bf16.msra.mxu0 %v63
  %91 = vmatprep.subr.bf16.mxu0 0
  %92 = vmatpush2.bf16.msra.mxu0 0
  %93 = vmatprep.subr.bf16.mxu0 0
  %94 = vmatpush2.bf16.msra.mxu0 0
  %95 = vmatprep.subr.bf16.mxu0 0
  %96 = vmatpush2.bf16.msra.mxu0 0
  %97 = vmatprep.subr.bf16.mxu0 0
  %98 = vmatpush2.bf16.msra.mxu0 0
  %99 = vmatprep.subr.bf16.mxu0 0
  %100 = vmatpush2.bf16.msra.mxu0 0
  %101 = vmatprep.subr.bf16.mxu0 0
  %102 = vmatpush2.bf16.msra.mxu0 0
  %103 = vmatprep.subr.bf16.mxu0 0
  %104 = vmatpush2.bf16.msra.mxu0 0
  %105 = vmatprep.subr.bf16.mxu0 0
  %106 = vmatpush2.bf16.msra.mxu0 0
  %107 = vmatprep.mubr.bf16.mxu0 0
  %108 = vmatmul.mubr.bf16.gmra.mxu0 %v73
  %v109 = vpop.f32.mrf.mxu0
  %v110 = vadd.f32 %v45, %v109
  %v111 = vpop.f32.mrf.mxu0
  %v112 = vpop.f32.mrf.mxu0
  %v113 = vpop.f32.mrf.mxu0
  %114 = vdwg.mxu0
  %v115 = vmax.f32 %v110, 0.0
  %v116 = vld [vmem:[%s3] sm:$0x1]
  %v117 = vlaneseq
  %v118 = vshrl.u32 %v117, 7
  %v119 = vsub.s32 0, %v118
  %v120 = vrot.slane %v116, %v119
  %v121 = vmul.f32 %v115, %v120
  %v122 = vld [vmem:[%s3 + $0x1] sm:$0x1]
  %v123 = vlaneseq
  %v124 = vshrl.u32 %v123, 7
  %v125 = vsub.s32 0, %v124
  %v126 = vrot.slane %v122, %v125
  %v127 = vadd.f32 %v121, %v126
  %v128 = vpack.c.bf16 %v127, %v127
  %v129 = vld [vmem:[%s4] sm:$0xf]
  %v130 = vld [vmem:[%s4 + $0x4] sm:$0xf]
  %v131 = vld [vmem:[%s4 + $0x8] sm:$0xf]
  %v132 = vld [vmem:[%s4 + $0xc] sm:$0xf]
  %v133 = vld [vmem:[%s4 + $0x10] sm:$0xf]
  %v134 = vld [vmem:[%s4 + $0x14] sm:$0xf]
  %v135 = vld [vmem:[%s4 + $0x18] sm:$0xf]
  %v136 = vld [vmem:[%s4 + $0x1c] sm:$0xf]
  %v137 = vld [vmem:[%s5] sm:$0x1]
  %v139 = vlaneseq
  %v140 = vshrl.u32 %v139, 7
  %v141 = vsub.s32 0, %v140
  %v142 = vrot.slane %v137, %v141
  %v152 = vunpack.c.l.b16 %v129
  %v153 = vunpack.c.l.b16 %v130
  %v154 = vunpack.c.l.b16 %v131
  %v155 = vunpack.c.l.b16 %v132
  %v156 = vunpack.c.l.b16 %v133
  %v157 = vunpack.c.l.b16 %v134
  %v158 = vunpack.c.l.b16 %v135
  %v159 = vunpack.c.l.b16 %v136
  %v160 = vpack.c.b16 %v153, %v152
  %v161 = vpack.c.b16 %v155, %v154
  %v162 = vpack.c.b16 %v157, %v156
  %v163 = vpack.c.b16 %v159, %v158
  %v169 = vsel %vm71, %v128, 0
  %171 = vmatprep.subr.bf16.mxu0 0
  %172 = vmatpush1.bf16.msra.mxu0 0
  %173 = vmatprep.subr.bf16.mxu0 0
  %174 = vmatpush1.bf16.msra.mxu0 0
  %175 = vmatprep.subr.bf16.mxu0 0
  %176 = vmatpush1.bf16.msra.mxu0 0
  %177 = vmatprep.subr.bf16.mxu0 0
  %178 = vmatpush1.bf16.msra.mxu0 0
  %179 = vmatprep.subr.bf16.mxu0 0
  %180 = vmatpush1.bf16.msra.mxu0 %v163
  %181 = vmatprep.subr.bf16.mxu0 0
  %182 = vmatpush1.bf16.msra.mxu0 %v162
  %183 = vmatprep.subr.bf16.mxu0 0
  %184 = vmatpush1.bf16.msra.mxu0 %v161
  %185 = vmatprep.subr.bf16.mxu0 0
  %186 = vmatpush1.bf16.msra.mxu0 %v160
  %187 = vmatprep.subr.bf16.mxu0 0
  %188 = vmatpush2.bf16.msra.mxu0 0
  %189 = vmatprep.subr.bf16.mxu0 0
  %190 = vmatpush2.bf16.msra.mxu0 0
  %191 = vmatprep.subr.bf16.mxu0 0
  %192 = vmatpush2.bf16.msra.mxu0 0
  %193 = vmatprep.subr.bf16.mxu0 0
  %194 = vmatpush2.bf16.msra.mxu0 0
  %195 = vmatprep.subr.bf16.mxu0 0
  %196 = vmatpush2.bf16.msra.mxu0 0
  %197 = vmatprep.subr.bf16.mxu0 0
  %198 = vmatpush2.bf16.msra.mxu0 0
  %199 = vmatprep.subr.bf16.mxu0 0
  %200 = vmatpush2.bf16.msra.mxu0 0
  %201 = vmatprep.subr.bf16.mxu0 0
  %202 = vmatpush2.bf16.msra.mxu0 0
  %203 = vmatprep.mubr.bf16.mxu0 0
  %204 = vmatmul.mubr.bf16.gmra.mxu0 %v169
  %v205 = vpop.f32.mrf.mxu0
  %v206 = vadd.f32 %v142, %v205
  %v207 = vpop.f32.mrf.mxu0
  %v208 = vpop.f32.mrf.mxu0
  %v209 = vpop.f32.mrf.mxu0
  %210 = vdwg.mxu0
  %v211 = vmax.f32 %v206, 0.0
  %v212 = vpack.c.bf16 %v211, %v211
  %v213 = vld [vmem:[%s6] sm:$0xf]
  %v214 = vld [vmem:[%s6 + $0x4] sm:$0xf]
  %v215 = vld [vmem:[%s6 + $0x8] sm:$0xf]
  %v216 = vld [vmem:[%s6 + $0xc] sm:$0xf]
  %v217 = vld [vmem:[%s6 + $0x10] sm:$0xf]
  %v218 = vld [vmem:[%s6 + $0x14] sm:$0xf]
  %v219 = vld [vmem:[%s6 + $0x18] sm:$0xf]
  %v220 = vld [vmem:[%s6 + $0x1c] sm:$0xf]
  %v221 = vld [vmem:[%s7] sm:$0x1]
  %v223 = vlaneseq
  %v224 = vshrl.u32 %v223, 7
  %v225 = vsub.s32 0, %v224
  %v226 = vrot.slane %v221, %v225
  %v236 = vunpack.c.l.b16 %v213
  %v237 = vunpack.c.l.b16 %v214
  %v238 = vunpack.c.l.b16 %v215
  %v239 = vunpack.c.l.b16 %v216
  %v240 = vunpack.c.l.b16 %v217
  %v241 = vunpack.c.l.b16 %v218
  %v242 = vunpack.c.l.b16 %v219
  %v243 = vunpack.c.l.b16 %v220
  %v244 = vpack.c.b16 %v237, %v236
  %v245 = vpack.c.b16 %v239, %v238
  %v246 = vpack.c.b16 %v241, %v240
  %v247 = vpack.c.b16 %v243, %v242
  %v253 = vsel %vm71, %v212, 0
  %255 = vmatprep.subr.bf16.mxu0 0
  %256 = vmatpush1.bf16.msra.mxu0 0
  %257 = vmatprep.subr.bf16.mxu0 0
  %258 = vmatpush1.bf16.msra.mxu0 0
  %259 = vmatprep.subr.bf16.mxu0 0
  %260 = vmatpush1.bf16.msra.mxu0 0
  %261 = vmatprep.subr.bf16.mxu0 0
  %262 = vmatpush1.bf16.msra.mxu0 0
  %263 = vmatprep.subr.bf16.mxu0 0
  %264 = vmatpush1.bf16.msra.mxu0 %v247
  %265 = vmatprep.subr.bf16.mxu0 0
  %266 = vmatpush1.bf16.msra.mxu0 %v246
  %267 = vmatprep.subr.bf16.mxu0 0
  %268 = vmatpush1.bf16.msra.mxu0 %v245
  %269 = vmatprep.subr.bf16.mxu0 0
  %270 = vmatpush1.bf16.msra.mxu0 %v244
  %271 = vmatprep.subr.bf16.mxu0 0
  %272 = vmatpush2.bf16.msra.mxu0 0
  %273 = vmatprep.subr.bf16.mxu0 0
  %274 = vmatpush2.bf16.msra.mxu0 0
  %275 = vmatprep.subr.bf16.mxu0 0
  %276 = vmatpush2.bf16.msra.mxu0 0
  %277 = vmatprep.subr.bf16.mxu0 0
  %278 = vmatpush2.bf16.msra.mxu0 0
  %279 = vmatprep.subr.bf16.mxu0 0
  %280 = vmatpush2.bf16.msra.mxu0 0
  %281 = vmatprep.subr.bf16.mxu0 0
  %282 = vmatpush2.bf16.msra.mxu0 0
  %283 = vmatprep.subr.bf16.mxu0 0
  %284 = vmatpush2.bf16.msra.mxu0 0
  %285 = vmatprep.subr.bf16.mxu0 0
  %286 = vmatpush2.bf16.msra.mxu0 0
  %287 = vmatprep.mubr.bf16.mxu0 0
  %288 = vmatmul.mubr.bf16.gmra.mxu0 %v253
  %v289 = vpop.f32.mrf.mxu0
  %v290 = vadd.f32 %v226, %v289
  %v291 = vpop.f32.mrf.mxu0
  %v292 = vpop.f32.mrf.mxu0
  %v293 = vpop.f32.mrf.mxu0
  %294 = vdwg.mxu0
  %v295 = vlaneseq
  %v296 = vand.u32 %v295, 127
  %vm297 = vcmp.lt.s32.totalorder %v296, 3
  %v298 = vsel %vm297, %v290, -1e+30
  %299 = vmax.xlane.f32.xlu0 %v298
  %v300 = vpop.xlane.xlu0 %299
  %v301 = vsub.f32 %v298, %v300
  %v302 = vmul.f32 %v301, 1.442695
  %v303 = vpow.pop %v302
  %v304 = vsel %vm297, %v303, 0.0
  %305 = vadd.xlane.f32.xlu0 %v304
  %v306 = vpop.xlane.xlu0 %305
  %v307 = vlog2.pop %v306
  %v308 = vmul.f32 %v307, 0.6931472
  %v309 = vsub.f32 %v301, %v308
  %v310 = vsel %vm297, %v309, 0.0
  %311 = vst [vmem:[%s8] sm:$0xff] %v310
  // Predicated region
  $region34: #{solubility_forward.3} parent=0 // pred_check
    _
  $region35: #{solubility_forward.3} parent=0 // pred_check_branch
    %313 = sbr.rel (0) target = $region37
  $region36: #{solubility_forward.3} parent=0 // pred_region
    _
  $region37: #{solubility_forward.3} parent=0 // pred_fallthru
    _
  // Predicated region
  $region38: #{solubility_forward.3} parent=0 // pred_check
    _
  $region39: #{solubility_forward.3} parent=0 // pred_check_branch
    %315 = sbr.rel (0) target = $region41
  $region40: #{solubility_forward.3} parent=0 // pred_region
    _
  $region41: #{solubility_forward.3} parent=0 // pred_fallthru
    _

// kernel: solubility_forward.2
$region0: #{solubility_forward.2}
  #allocation0 [shape = 'u32[]', space=smem, size = 0x4, offset = 0x4, fixed_abs, tag = 'smem constant byte address 0x4 - core index']
  #allocation1 [shape = 'u32[144,128]{1,0:T(1,128)}', space=vmem, size = 0x12000, scoped, tag = 'internal scratch']
  %s0 = inlined_call_operand.vmem [shape: bf16[2,8,8], index: 0, kind: input, shape index: {}]
  %s1 = inlined_call_operand.vmem [shape: bf16[2,8,32], index: 1, kind: input, shape index: {}]
  %s2 = inlined_call_operand.vmem [shape: bf16[32,128], index: 2, kind: input, shape index: {}]
  %s3 = inlined_call_operand.vmem [shape: f32[1,128], index: 3, kind: input, shape index: {}]
  %s4 = inlined_call_operand.vmem [shape: f32[2,128], index: 4, kind: input, shape index: {}]
  %s5 = inlined_call_operand.vmem [shape: bf16[128,64], index: 5, kind: input, shape index: {}]
  %s6 = inlined_call_operand.vmem [shape: f32[1,64], index: 6, kind: input, shape index: {}]
  %s7 = inlined_call_operand.vmem [shape: f32[2,64], index: 7, kind: input, shape index: {}]
  %s8 = inlined_call_operand.vmem [shape: f32[2,1,64], index: 8, kind: output, shape index: {}]
  %s9 = sld [smem:[#allocation0]]
  $region65: #{solubility_forward.2} parent=0
    _
  %s11 = ssub.s32 1, %s9
  %s12 = scalar_select 0, %s11, %s9
  loop: start=0, step=1, limit=4
  $region2: #{solubility_forward.2} parent=0 // loop_pre_header
    _
  $region3: #{solubility_forward.2} parent=0 // loop_header
    %s14 = sphi 0, %s18
    %p15 = scmp.ge.s32.totalorder %s14, 4
    %s24 = sphi 0, %s26
    %s27 = sphi 0, %s24
    %s28 = sphi 0, %s27
    %s44 = sphi 0, %s28
    %s50 = sphi 0, %s52
    %s53 = sphi 0, %s50
    %s54 = sphi 0, %s53
    %s70 = sphi 0, %s54
    %s74 = sphi 0, %s74
    %s76 = sphi 0, %s74
    %s77 = sphi 0, %s76
    %s91 = sphi 0, %s77
    %s95 = sphi 0, %s95
    %s97 = sphi 0, %s95
    %s98 = sphi 0, %s97
    %s112 = sphi 0, %s98
    %s116 = sphi 0, %s116
    %s118 = sphi 0, %s116
    %s119 = sphi 0, %s118
    %s133 = sphi 0, %s119
    %s137 = sphi 0, %s137
    %s139 = sphi 0, %s137
    %s140 = sphi 0, %s139
    %s154 = sphi 0, %s140
    %s158 = sphi 0, %s158
    %s160 = sphi 0, %s158
    %s161 = sphi 0, %s160
    %s175 = sphi 0, %s161
    %s179 = sphi 0, %s179
    %s181 = sphi 0, %s179
    %s182 = sphi 0, %s181
    %s196 = sphi 0, %s182
    %s202 = sphi 0, %s204
    %s205 = sphi 0, %s202
    %s206 = sphi 0, %s205
    %s222 = sphi 0, %s206
  $region4: #{solubility_forward.2} parent=0 // loop_header_branch
    %17 = sbr.rel (%p15) target = $region8
  $region5: #{solubility_forward.2} parent=0 // loop_body
    %s19 = ssub.s32 %s14, 1
    %s20 = ssub.s32 %s14, 2
    %s21 = sadd.s32 %s14, 1
    %s22 = ssub.s32 %s14, %s21
    %p23 = scmp.eq.s32.totalorder %s22, 0
    %s25 = sadd.s32 %s24, 1
    %s26 = scalar_select %p23, %s24, %s25
    %p29 = pneg %p23
    %p30 = scmp.eq.s32.totalorder %s14, 1
    %p31 = por %p29, %p30
    %p32 = scmp.ne.s32.totalorder %s24, %s27
    %p33 = scmp.eq.s32.totalorder %s14, 0
    %p34 = por %p32, %p33
    %p35 = scmp.ne.s32.totalorder %s24, %s27
    %p36 = scmp.eq.s32.totalorder %s19, 1
    %p37 = por %p35, %p36
    %p38 = scmp.ne.s32.totalorder %s27, %s28
    %p39 = scmp.eq.s32.totalorder %s19, 0
    %p40 = por %p38, %p39
    %p41 = scmp.ne.s32.totalorder %s27, %s28
    %p42 = scmp.eq.s32.totalorder %s20, 1
    %p43 = por %p41, %p42
    %p45 = scmp.ne.s32.totalorder %s28, %s44
    %p46 = scmp.eq.s32.totalorder %s20, 0
    %p47 = por %p45, %p46
    %s48 = ssub.s32 %s14, %s21
    %p49 = scmp.eq.s32.totalorder %s48, 0
    %s51 = sadd.s32 %s50, 1
    %s52 = scalar_select %p49, %s50, %s51
    %p55 = pneg %p49
    %p56 = scmp.eq.s32.totalorder %s14, 1
    %p57 = por %p55, %p56
    %p58 = scmp.ne.s32.totalorder %s50, %s53
    %p59 = scmp.eq.s32.totalorder %s14, 0
    %p60 = por %p58, %p59
    %p61 = scmp.ne.s32.totalorder %s50, %s53
    %p62 = scmp.eq.s32.totalorder %s19, 1
    %p63 = por %p61, %p62
    %p64 = scmp.ne.s32.totalorder %s53, %s54
    %p65 = scmp.eq.s32.totalorder %s19, 0
    %p66 = por %p64, %p65
    %p67 = scmp.ne.s32.totalorder %s53, %s54
    %p68 = scmp.eq.s32.totalorder %s20, 1
    %p69 = por %p67, %p68
    %p71 = scmp.ne.s32.totalorder %s54, %s70
    %p72 = scmp.eq.s32.totalorder %s20, 0
    %p73 = por %p71, %p72
    %s75 = sadd.s32 %s74, 1
    %p78 = scmp.eq.s32.totalorder %s14, 1
    %p79 = scmp.ne.s32.totalorder %s74, %s76
    %p80 = scmp.eq.s32.totalorder %s14, 0
    %p81 = por %p79, %p80
    %p82 = scmp.ne.s32.totalorder %s74, %s76
    %p83 = scmp.eq.s32.totalorder %s19, 1
    %p84 = por %p82, %p83
    %p85 = scmp.ne.s32.totalorder %s76, %s77
    %p86 = scmp.eq.s32.totalorder %s19, 0
    %p87 = por %p85, %p86
    %p88 = scmp.ne.s32.totalorder %s76, %s77
    %p89 = scmp.eq.s32.totalorder %s20, 1
    %p90 = por %p88, %p89
    %p92 = scmp.ne.s32.totalorder %s77, %s91
    %p93 = scmp.eq.s32.totalorder %s20, 0
    %p94 = por %p92, %p93
    %s96 = sadd.s32 %s95, 1
    %p99 = scmp.eq.s32.totalorder %s14, 1
    %p100 = scmp.ne.s32.totalorder %s95, %s97
    %p101 = scmp.eq.s32.totalorder %s14, 0
    %p102 = por %p100, %p101
    %p103 = scmp.ne.s32.totalorder %s95, %s97
    %p104 = scmp.eq.s32.totalorder %s19, 1
    %p105 = por %p103, %p104
    %p106 = scmp.ne.s32.totalorder %s97, %s98
    %p107 = scmp.eq.s32.totalorder %s19, 0
    %p108 = por %p106, %p107
    %p109 = scmp.ne.s32.totalorder %s97, %s98
    %p110 = scmp.eq.s32.totalorder %s20, 1
    %p111 = por %p109, %p110
    %p113 = scmp.ne.s32.totalorder %s98, %s112
    %p114 = scmp.eq.s32.totalorder %s20, 0
    %p115 = por %p113, %p114
    %s117 = sadd.s32 %s116, 1
    %p120 = scmp.eq.s32.totalorder %s14, 1
    %p121 = scmp.ne.s32.totalorder %s116, %s118
    %p122 = scmp.eq.s32.totalorder %s14, 0
    %p123 = por %p121, %p122
    %p124 = scmp.ne.s32.totalorder %s116, %s118
    %p125 = scmp.eq.s32.totalorder %s19, 1
    %p126 = por %p124, %p125
    %p127 = scmp.ne.s32.totalorder %s118, %s119
    %p128 = scmp.eq.s32.totalorder %s19, 0
    %p129 = por %p127, %p128
    %p130 = scmp.ne.s32.totalorder %s118, %s119
    %p131 = scmp.eq.s32.totalorder %s20, 1
    %p132 = por %p130, %p131
    %p134 = scmp.ne.s32.totalorder %s119, %s133
    %p135 = scmp.eq.s32.totalorder %s20, 0
    %p136 = por %p134, %p135
    %s138 = sadd.s32 %s137, 1
    %p141 = scmp.eq.s32.totalorder %s14, 1
    %p142 = scmp.ne.s32.totalorder %s137, %s139
    %p143 = scmp.eq.s32.totalorder %s14, 0
    %p144 = por %p142, %p143
    %p145 = scmp.ne.s32.totalorder %s137, %s139
    %p146 = scmp.eq.s32.totalorder %s19, 1
    %p147 = por %p145, %p146
    %p148 = scmp.ne.s32.totalorder %s139, %s140
    %p149 = scmp.eq.s32.totalorder %s19, 0
    %p150 = por %p148, %p149
    %p151 = scmp.ne.s32.totalorder %s139, %s140
    %p152 = scmp.eq.s32.totalorder %s20, 1
    %p153 = por %p151, %p152
    %p155 = scmp.ne.s32.totalorder %s140, %s154
    %p156 = scmp.eq.s32.totalorder %s20, 0
    %p157 = por %p155, %p156
    %s159 = sadd.s32 %s158, 1
    %p162 = scmp.eq.s32.totalorder %s14, 1
    %p163 = scmp.ne.s32.totalorder %s158, %s160
    %p164 = scmp.eq.s32.totalorder %s14, 0
    %p165 = por %p163, %p164
    %p166 = scmp.ne.s32.totalorder %s158, %s160
    %p167 = scmp.eq.s32.totalorder %s19, 1
    %p168 = por %p166, %p167
    %p169 = scmp.ne.s32.totalorder %s160, %s161
    %p170 = scmp.eq.s32.totalorder %s19, 0
    %p171 = por %p169, %p170
    %p172 = scmp.ne.s32.totalorder %s160, %s161
    %p173 = scmp.eq.s32.totalorder %s20, 1
    %p174 = por %p172, %p173
    %p176 = scmp.ne.s32.totalorder %s161, %s175
    %p177 = scmp.eq.s32.totalorder %s20, 0
    %p178 = por %p176, %p177
    %s180 = sadd.s32 %s179, 1
    %p183 = scmp.eq.s32.totalorder %s14, 1
    %p184 = scmp.ne.s32.totalorder %s179, %s181
    %p185 = scmp.eq.s32.totalorder %s14, 0
    %p186 = por %p184, %p185
    %p187 = scmp.ne.s32.totalorder %s179, %s181
    %p188 = scmp.eq.s32.totalorder %s19, 1
    %p189 = por %p187, %p188
    %p190 = scmp.ne.s32.totalorder %s181, %s182
    %p191 = scmp.eq.s32.totalorder %s19, 0
    %p192 = por %p190, %p191
    %p193 = scmp.ne.s32.totalorder %s181, %s182
    %p194 = scmp.eq.s32.totalorder %s20, 1
    %p195 = por %p193, %p194
    %p197 = scmp.ne.s32.totalorder %s182, %s196
    %p198 = scmp.eq.s32.totalorder %s20, 0
    %p199 = por %p197, %p198
    %s200 = ssub.s32 %s14, %s21
    %p201 = scmp.eq.s32.totalorder %s200, 0
    %s203 = sadd.s32 %s202, 1
    %s204 = scalar_select %p201, %s202, %s203
    %p207 = pneg %p201
    %p208 = scmp.eq.s32.totalorder %s14, 1
    %p209 = por %p207, %p208
    %p210 = scmp.ne.s32.totalorder %s202, %s205
    %p211 = scmp.eq.s32.totalorder %s14, 0
    %p212 = por %p210, %p211
    %p213 = scmp.ne.s32.totalorder %s202, %s205
    %p214 = scmp.eq.s32.totalorder %s19, 1
    %p215 = por %p213, %p214
    %p216 = scmp.ne.s32.totalorder %s205, %s206
    %p217 = scmp.eq.s32.totalorder %s19, 0
    %p218 = por %p216, %p217
    %p219 = scmp.ne.s32.totalorder %s205, %s206
    %p220 = scmp.eq.s32.totalorder %s20, 1
    %p221 = por %p219, %p220
    %p223 = scmp.ne.s32.totalorder %s206, %s222
    %p224 = scmp.eq.s32.totalorder %s20, 0
    %p225 = por %p223, %p224
    %p226 = scmp.le.s32.totalorder 1, %s14
    %p227 = scmp.lt.s32.totalorder %s14, 3
    %p228 = pnand %p226, %p227
    %p229 = pneg %p228
    // Predicated region
    $region9: #{solubility_forward.2} parent=5 // pred_check
      _
    $region10: #{solubility_forward.2} parent=5 // pred_check_branch
      %231 = sbr.rel (%p228) target = $region12
    $region11: #{solubility_forward.2} parent=5 // pred_region
      %s232 = ssub.s32 %s14, 1
      // Predicated region
      $region13: #{solubility_forward.2} parent=11 // pred_check
        %p233 = pneg %p87
      $region14: #{solubility_forward.2} parent=11 // pred_check_branch
        %235 = sbr.rel (%p233) target = $region16
      $region15: #{solubility_forward.2} parent=11 // pred_region
        _
      $region16: #{solubility_forward.2} parent=11 // pred_fallthru
        _
      // Predicated region
      $region17: #{solubility_forward.2} parent=11 // pred_check
        %p236 = pneg %p108
      $region18: #{solubility_forward.2} parent=11 // pred_check_branch
        %238 = sbr.rel (%p236) target = $region20
      $region19: #{solubility_forward.2} parent=11 // pred_region
        _
      $region20: #{solubility_forward.2} parent=11 // pred_fallthru
        _
      // Predicated region
      $region21: #{solubility_forward.2} parent=11 // pred_check
        %p239 = pneg %p129
      $region22: #{solubility_forward.2} parent=11 // pred_check_branch
        %241 = sbr.rel (%p239) target = $region24
      $region23: #{solubility_forward.2} parent=11 // pred_region
        _
      $region24: #{solubility_forward.2} parent=11 // pred_fallthru
        _
      // Predicated region
      $region25: #{solubility_forward.2} parent=11 // pred_check
        %p242 = pneg %p150
      $region26: #{solubility_forward.2} parent=11 // pred_check_branch
        %244 = sbr.rel (%p242) target = $region28
      $region27: #{solubility_forward.2} parent=11 // pred_region
        _
      $region28: #{solubility_forward.2} parent=11 // pred_fallthru
        _
      // Predicated region
      $region29: #{solubility_forward.2} parent=11 // pred_check
        %p245 = pneg %p171
      $region30: #{solubility_forward.2} parent=11 // pred_check_branch
        %247 = sbr.rel (%p245) target = $region32
      $region31: #{solubility_forward.2} parent=11 // pred_region
        _
      $region32: #{solubility_forward.2} parent=11 // pred_fallthru
        _
      // Predicated region
      $region33: #{solubility_forward.2} parent=11 // pred_check
        %p248 = pneg %p192
      $region34: #{solubility_forward.2} parent=11 // pred_check_branch
        %250 = sbr.rel (%p248) target = $region36
      $region35: #{solubility_forward.2} parent=11 // pred_region
        _
      $region36: #{solubility_forward.2} parent=11 // pred_fallthru
        _
    $region12: #{solubility_forward.2} parent=5 // pred_fallthru
      _
    %p251 = scmp.lt.s32.totalorder %s14, 2
    // Predicated region
    $region37: #{solubility_forward.2} parent=5 // pred_check
      %p252 = pneg %p251
    $region38: #{solubility_forward.2} parent=5 // pred_check_branch
      %254 = sbr.rel (%p252) target = $region40
    $region39: #{solubility_forward.2} parent=5 // pred_region
      // Predicated region
      $region41: #{solubility_forward.2} parent=39 // pred_check
        %p255 = pneg %p34
      $region42: #{solubility_forward.2} parent=39 // pred_check_branch
        %257 = sbr.rel (%p255) target = $region44
      $region43: #{solubility_forward.2} parent=39 // pred_region
        %p258 = scmp.lt.s32.totalorder %s14, 1
        %s259 = scalar_select %p258, %s14, 1
        %s260 = smul.addr %s259, 4
        %s261 = scalar_lea.vmem %s0, %s260
      $region44: #{solubility_forward.2} parent=39 // pred_fallthru
        _
      // Predicated region
      $region45: #{solubility_forward.2} parent=39 // pred_check
        %p262 = pneg %p60
      $region46: #{solubility_forward.2} parent=39 // pred_check_branch
        %264 = sbr.rel (%p262) target = $region48
      $region47: #{solubility_forward.2} parent=39 // pred_region
        %p265 = scmp.lt.s32.totalorder %s14, 1
        %s266 = scalar_select %p265, %s14, 1
        %s267 = smul.addr %s266, 4
        %s268 = scalar_lea.vmem %s1, %s267
      $region48: #{solubility_forward.2} parent=39 // pred_fallthru
        _
    $region40: #{solubility_forward.2} parent=5 // pred_fallthru
      _
    %p269 = scmp.le.s32.totalorder 1, %s14
    %p270 = scmp.lt.s32.totalorder %s14, 3
    %p271 = pnand %p269, %p270
    %p272 = pneg %p271
    // Predicated region
    $region49: #{solubility_forward.2} parent=5 // pred_check
      _
    $region50: #{solubility_forward.2} parent=5 // pred_check_branch
      %274 = sbr.rel (%p271) target = $region52
    $region51: #{solubility_forward.2} parent=5 // pred_region
      %s275 = ssub.s32 %s14, 1
      %p276 = scmp.lt.s32.totalorder %s19, 1
      %s277 = scalar_select %p276, %s19, 1
      %s278 = smul.addr %s277, 4
      %s279 = scalar_lea.vmem %s0, %s278
      %p280 = pneg %p40
      %p281 = pneg %p37
      %p282 = scmp.lt.s32.totalorder %s19, 1
      %s283 = scalar_select %p282, %s19, 1
      %s284 = smul.addr %s283, 4
      %s285 = scalar_lea.vmem %s1, %s284
      %p286 = pneg %p66
      %p287 = pneg %p63
      %p288 = pneg %p87
      %p289 = pneg %p84
      %p290 = pneg %p108
      %p291 = pneg %p105
      %p292 = pneg %p129
      %p293 = pneg %p126
      %p294 = pneg %p150
      %p295 = pneg %p147
      %p296 = pneg %p171
      %p297 = pneg %p168
      %p298 = pneg %p192
      %p299 = pneg %p189
      %p300 = pneg %p218
      %p301 = pneg %p215
      %p302 = scmp.lt.s32.totalorder %s19, 1
      %s303 = scalar_select %p302, %s19, 1
      %s304 = scalar_lea.vmem %s8, %s303
      %p305 = scmp.lt.s32.totalorder %s19, 1
      %s306 = scalar_select %p305, %s19, 1
      %s307 = smul.addr %s306, 4
      %s308 = scalar_lea.vmem %s0, %s307
      %p309 = scmp.lt.s32.totalorder %s19, 1
      %s310 = scalar_select %p309, %s19, 1
      %s311 = smul.addr %s310, 4
      %s312 = scalar_lea.vmem %s1, %s311
      %p313 = scmp.lt.s32.totalorder %s19, 1
      %s314 = scalar_select %p313, %s19, 1
      %s315 = scalar_lea.vmem %s8, %s314
      %v317 = vld [vmem:[%s308] sm:$0xf]
      %v318 = vld [vmem:[%s312] sm:$0xf]
      %vm319 = vcmask 64512
      %v321 = vsel %vm319, %v317, 0
      %vm323 = vcmask 1043456
      %v325 = vsel %vm323, %v318, 0
      %327 = vmatprep.subr.bf16.mxu0 0
      %328 = vmatpush1.bf16.msra.mxu0 0
      %329 = vmatprep.subr.bf16.mxu0 0
      %330 = vmatpush1.bf16.msra.mxu0 0
      %331 = vmatprep.subr.bf16.mxu0 0
      %332 = vmatpush1.bf16.msra.mxu0 0
      %333 = vmatprep.subr.bf16.mxu0 0
      %334 = vmatpush1.bf16.msra.mxu0 0
      %335 = vmatprep.subr.bf16.mxu0 0
      %336 = vmatpush1.bf16.msra.mxu0 0
      %337 = vmatprep.subr.bf16.mxu0 0
      %338 = vmatpush1.bf16.msra.mxu0 0
      %339 = vmatprep.subr.bf16.mxu0 0
      %340 = vmatpush1.bf16.msra.mxu0 0
      %341 = vmatprep.subr.bf16.mxu0 0
      %342 = vmatpush1.bf16.msra.mxu0 %v325
      %343 = vmatprep.subr.bf16.mxu0 0
      %344 = vmatpush2.bf16.msra.mxu0 0
      %345 = vmatprep.subr.bf16.mxu0 0
      %346 = vmatpush2.bf16.msra.mxu0 0
      %347 = vmatprep.subr.bf16.mxu0 0
      %348 = vmatpush2.bf16.msra.mxu0 0
      %349 = vmatprep.subr.bf16.mxu0 0
      %350 = vmatpush2.bf16.msra.mxu0 0
      %351 = vmatprep.subr.bf16.mxu0 0
      %352 = vmatpush2.bf16.msra.mxu0 0
      %353 = vmatprep.subr.bf16.mxu0 0
      %354 = vmatpush2.bf16.msra.mxu0 0
      %355 = vmatprep.subr.bf16.mxu0 0
      %356 = vmatpush2.bf16.msra.mxu0 0
      %357 = vmatprep.subr.bf16.mxu0 0
      %358 = vmatpush2.bf16.msra.mxu0 0
      %359 = vmatprep.mubr.bf16.mxu0 0
      %360 = vmatmul.mubr.bf16.gmra.mxu0 %v321
      %v361 = vpop.f32.mrf.mxu0
      %v362 = vadd.f32 0.0, %v361
      %v363 = vpop.f32.mrf.mxu0
      %v364 = vpop.f32.mrf.mxu0
      %v365 = vpop.f32.mrf.mxu0
      %366 = vdwg.mxu0
      %v367 = vpack.c.bf16 %v362, %v362
      %v368 = vld [vmem:[%s2] sm:$0xf]
      %v369 = vld [vmem:[%s2 + $0x4] sm:$0xf]
      %v370 = vld [vmem:[%s2 + $0x8] sm:$0xf]
      %v371 = vld [vmem:[%s2 + $0xc] sm:$0xf]
      %v372 = vld [vmem:[%s3] sm:$0x1]
      %v374 = vlaneseq
      %v375 = vshrl.u32 %v374, 7
      %v376 = vsub.s32 0, %v375
      %v377 = vrot.slane %v372, %v376
      %v383 = vunpack.c.l.b16 %v368
      %v384 = vunpack.c.l.b16 %v369
      %v385 = vunpack.c.l.b16 %v370
      %v386 = vunpack.c.l.b16 %v371
      %v387 = vpack.c.b16 %v384, %v383
      %v388 = vpack.c.b16 %v386, %v385
      %vm391 = vcmask 261120
      %v393 = vsel %vm391, %v367, 0
      %395 = vmatprep.subr.bf16.mxu0 0
      %396 = vmatpush1.bf16.msra.mxu0 0
      %397 = vmatprep.subr.bf16.mxu0 0
      %398 = vmatpush1.bf16.msra.mxu0 0
      %399 = vmatprep.subr.bf16.mxu0 0
      %400 = vmatpush1.bf16.msra.mxu0 0
      %401 = vmatprep.subr.bf16.mxu0 0
      %402 = vmatpush1.bf16.msra.mxu0 0
      %403 = vmatprep.subr.bf16.mxu0 0
      %404 = vmatpush1.bf16.msra.mxu0 0
      %405 = vmatprep.subr.bf16.mxu0 0
      %406 = vmatpush1.bf16.msra.mxu0 0
      %407 = vmatprep.subr.bf16.mxu0 0
      %408 = vmatpush1.bf16.msra.mxu0 %v388
      %409 = vmatprep.subr.bf16.mxu0 0
      %410 = vmatpush1.bf16.msra.mxu0 %v387
      %411 = vmatprep.subr.bf16.mxu0 0
      %412 = vmatpush2.bf16.msra.mxu0 0
      %413 = vmatprep.subr.bf16.mxu0 0
      %414 = vmatpush2.bf16.msra.mxu0 0
      %415 = vmatprep.subr.bf16.mxu0 0
      %416 = vmatpush2.bf16.msra.mxu0 0
      %417 = vmatprep.subr.bf16.mxu0 0
      %418 = vmatpush2.bf16.msra.mxu0 0
      %419 = vmatprep.subr.bf16.mxu0 0
      %420 = vmatpush2.bf16.msra.mxu0 0
      %421 = vmatprep.subr.bf16.mxu0 0
      %422 = vmatpush2.bf16.msra.mxu0 0
      %423 = vmatprep.subr.bf16.mxu0 0
      %424 = vmatpush2.bf16.msra.mxu0 0
      %425 = vmatprep.subr.bf16.mxu0 0
      %426 = vmatpush2.bf16.msra.mxu0 0
      %427 = vmatprep.mubr.bf16.mxu0 0
      %428 = vmatmul.mubr.bf16.gmra.mxu0 %v393
      %v429 = vpop.f32.mrf.mxu0
      %v430 = vadd.f32 %v377, %v429
      %v431 = vpop.f32.mrf.mxu0
      %v432 = vpop.f32.mrf.mxu0
      %v433 = vpop.f32.mrf.mxu0
      %434 = vdwg.mxu0
      %v435 = vmax.f32 %v430, 0.0
      %v436 = vld [vmem:[%s4] sm:$0x1]
      %v437 = vlaneseq
      %v438 = vshrl.u32 %v437, 7
      %v439 = vsub.s32 0, %v438
      %v440 = vrot.slane %v436, %v439
      %v441 = vmul.f32 %v435, %v440
      %v442 = vld [vmem:[%s4 + $0x1] sm:$0x1]
      %v443 = vlaneseq
      %v444 = vshrl.u32 %v443, 7
      %v445 = vsub.s32 0, %v444
      %v446 = vrot.slane %v442, %v445
      %v447 = vadd.f32 %v441, %v446
      %v448 = vpack.c.bf16 %v447, %v447
      %v449 = vld [vmem:[%s5] sm:$0xf]
      %v450 = vld [vmem:[%s5 + $0x4] sm:$0xf]
      %v451 = vld [vmem:[%s5 + $0x8] sm:$0xf]
      %v452 = vld [vmem:[%s5 + $0xc] sm:$0xf]
      %v453 = vld [vmem:[%s5 + $0x10] sm:$0xf]
      %v454 = vld [vmem:[%s5 + $0x14] sm:$0xf]
      %v455 = vld [vmem:[%s5 + $0x18] sm:$0xf]
      %v456 = vld [vmem:[%s5 + $0x1c] sm:$0xf]
      %v457 = vld [vmem:[%s5 + $0x20] sm:$0xf]
      %v458 = vld [vmem:[%s5 + $0x24] sm:$0xf]
      %v459 = vld [vmem:[%s5 + $0x28] sm:$0xf]
      %v460 = vld [vmem:[%s5 + $0x2c] sm:$0xf]
      %v461 = vld [vmem:[%s5 + $0x30] sm:$0xf]
      %v462 = vld [vmem:[%s5 + $0x34] sm:$0xf]
      %v463 = vld [vmem:[%s5 + $0x38] sm:$0xf]
      %v464 = vld [vmem:[%s5 + $0x3c] sm:$0xf]
      %v481 = vunpack.c.l.b16 %v449
      %v482 = vunpack.c.l.b16 %v450
      %v483 = vunpack.c.l.b16 %v451
      %v484 = vunpack.c.l.b16 %v452
      %v485 = vunpack.c.l.b16 %v453
      %v486 = vunpack.c.l.b16 %v454
      %v487 = vunpack.c.l.b16 %v455
      %v488 = vunpack.c.l.b16 %v456
      %v489 = vunpack.c.l.b16 %v457
      %v490 = vunpack.c.l.b16 %v458
      %v491 = vunpack.c.l.b16 %v459
      %v492 = vunpack.c.l.b16 %v460
      %v493 = vunpack.c.l.b16 %v461
      %v494 = vunpack.c.l.b16 %v462
      %v495 = vunpack.c.l.b16 %v463
      %v496 = vunpack.c.l.b16 %v464
      %v497 = vpack.c.b16 %v482, %v481
      %v498 = vpack.c.b16 %v484, %v483
      %v499 = vpack.c.b16 %v486, %v485
      %v500 = vpack.c.b16 %v488, %v487
      %v501 = vpack.c.b16 %v490, %v489
      %v502 = vpack.c.b16 %v492, %v491
      %v503 = vpack.c.b16 %v494, %v493
      %v504 = vpack.c.b16 %v496, %v495
      %513 = vmatprep.subr.bf16.mxu0 0
      %514 = vmatpush1.bf16.msra.mxu0 %v504
      %515 = vmatprep.subr.bf16.mxu0 0
      %516 = vmatpush1.bf16.msra.mxu0 %v503
      %517 = vmatprep.subr.bf16.mxu0 0
      %518 = vmatpush1.bf16.msra.mxu0 %v502
      %519 = vmatprep.subr.bf16.mxu0 0
      %520 = vmatpush1.bf16.msra.mxu0 %v501
      %521 = vmatprep.subr.bf16.mxu0 0
      %522 = vmatpush1.bf16.msra.mxu0 %v500
      %523 = vmatprep.subr.bf16.mxu0 0
      %524 = vmatpush1.bf16.msra.mxu0 %v499
      %525 = vmatprep.subr.bf16.mxu0 0
      %526 = vmatpush1.bf16.msra.mxu0 %v498
      %527 = vmatprep.subr.bf16.mxu0 0
      %528 = vmatpush1.bf16.msra.mxu0 %v497
      %529 = vmatprep.subr.bf16.mxu0 0
      %530 = vmatpush2.bf16.msra.mxu0 0
      %531 = vmatprep.subr.bf16.mxu0 0
      %532 = vmatpush2.bf16.msra.mxu0 0
      %533 = vmatprep.subr.bf16.mxu0 0
      %534 = vmatpush2.bf16.msra.mxu0 0
      %535 = vmatprep.subr.bf16.mxu0 0
      %536 = vmatpush2.bf16.msra.mxu0 0
      %537 = vmatprep.subr.bf16.mxu0 0
      %538 = vmatpush2.bf16.msra.mxu0 0
      %539 = vmatprep.subr.bf16.mxu0 0
      %540 = vmatpush2.bf16.msra.mxu0 0
      %541 = vmatprep.subr.bf16.mxu0 0
      %542 = vmatpush2.bf16.msra.mxu0 0
      %543 = vmatprep.subr.bf16.mxu0 0
      %544 = vmatpush2.bf16.msra.mxu0 0
      %545 = vmatprep.mubr.bf16.mxu0 0
      %546 = vmatmul.mubr.bf16.gmra.mxu0 %v448
      %v547 = vpop.f32.mrf.mxu0
      %v548 = vadd.f32 0.0, %v547
      %v549 = vpop.f32.mrf.mxu0
      %v550 = vpop.f32.mrf.mxu0
      %v551 = vpop.f32.mrf.mxu0
      %552 = vdwg.mxu0
      %v553 = vpack.c.bf16 %v548, %v548
      %v554 = vld [vmem:[%s6] sm:$0x1]
      %v556 = vlaneseq
      %v557 = vshrl.u32 %v556, 7
      %v558 = vsub.s32 0, %v557
      %v559 = vrot.slane %v554, %v558
      %v562 = vsel %vm323, %v553, 0
      %564 = vmatprep.subr.bf16.mxu0 0
      %565 = vmatpush1.bf16.msra.mxu0 0
      %566 = vmatprep.subr.bf16.mxu0 0
      %567 = vmatpush1.bf16.msra.mxu0 0
      %568 = vmatprep.subr.bf16.mxu0 0
      %569 = vmatpush1.bf16.msra.mxu0 0
      %570 = vmatprep.subr.bf16.mxu0 0
      %571 = vmatpush1.bf16.msra.mxu0 0
      %572 = vmatprep.subr.bf16.mxu0 0
      %573 = vmatpush1.bf16.msra.mxu0 0
      %574 = vmatprep.subr.bf16.mxu0 0
      %575 = vmatpush1.bf16.msra.mxu0 0
      %576 = vmatprep.subr.bf16.mxu0 0
      %577 = vmatpush1.bf16.msra.mxu0 0
      %578 = vmatprep.subr.bf16.mxu0 0
      %579 = vmatpush1.bf16.msra.mxu0 %v562
      %580 = vmatprep.subr.bf16.mxu0 0
      %581 = vmatpush2.bf16.msra.mxu0 0
      %582 = vmatprep.subr.bf16.mxu0 0
      %583 = vmatpush2.bf16.msra.mxu0 0
      %584 = vmatprep.subr.bf16.mxu0 0
      %585 = vmatpush2.bf16.msra.mxu0 0
      %586 = vmatprep.subr.bf16.mxu0 0
      %587 = vmatpush2.bf16.msra.mxu0 0
      %588 = vmatprep.subr.bf16.mxu0 0
      %589 = vmatpush2.bf16.msra.mxu0 0
      %590 = vmatprep.subr.bf16.mxu0 0
      %591 = vmatpush2.bf16.msra.mxu0 0
      %592 = vmatprep.subr.bf16.mxu0 0
      %593 = vmatpush2.bf16.msra.mxu0 0
      %594 = vmatprep.subr.bf16.mxu0 0
      %595 = vmatpush2.bf16.msra.mxu0 0
      %596 = vmatprep.mubr.bf16.mxu0 0
      %597 = vmatmul.mubr.bf16.gmra.mxu0 %v321
      %v598 = vpop.f32.mrf.mxu0
      %v599 = vadd.f32 %v559, %v598
      %v600 = vpop.f32.mrf.mxu0
      %v601 = vpop.f32.mrf.mxu0
      %v602 = vpop.f32.mrf.mxu0
      %603 = vdwg.mxu0
      %v604 = vmax.f32 %v599, 0.0
      %v605 = vld [vmem:[%s7] sm:$0x1]
      %v606 = vlaneseq
      %v607 = vshrl.u32 %v606, 7
      %v608 = vsub.s32 0, %v607
      %v609 = vrot.slane %v605, %v608
      %v610 = vmul.f32 %v604, %v609
      %v611 = vld [vmem:[%s7 + $0x1] sm:$0x1]
      %v612 = vlaneseq
      %v613 = vshrl.u32 %v612, 7
      %v614 = vsub.s32 0, %v613
      %v615 = vrot.slane %v611, %v614
      %v616 = vadd.f32 %v610, %v615
      %v617 = vunpack.c.l.bf16 %v317
      %v618 = vsel %vm319, %v617, 0.0
      %619 = vadd.xlane.f32.xlu0 %v618
      %v620 = vpop.xlane.xlu0 %619
      %vm621 = vcmp.gt.f32.partialorder %v620, 0.0
      %v622 = vsel %vm621, 1, 0
      %vm623 = vcmp.eq.s32.totalorder %v622, 1
      %v624 = vsel %vm623, %v616, 0.0
      %vm625 = vcmask 523264
      %v626 = vsel %vm625, %v624, 0.0
      %v627 = vrot.slane %v626, 4
      %v628 = vadd.f32 %v626, %v627
      %v629 = vrot.slane %v628, 2
      %v630 = vadd.f32 %v628, %v629
      %v631 = vrot.slane %v630, 1
      %v632 = vadd.f32 %v630, %v631
      %vm633 = vcmask 516096
      %634 = vst.msk [vmem:[%s315] sm:$0x1] %vm633, %v632
      %p635 = scmp.lt.s32.totalorder %s19, 1
      %s636 = scalar_select %p635, %s19, 1
      %s637 = scalar_lea.vmem %s8, %s636
      // Predicated region
      $region53: #{solubility_forward.2} parent=51 // pred_check
        %p638 = pneg %p215
      $region54: #{solubility_forward.2} parent=51 // pred_check_branch
        %640 = sbr.rel (%p638) target = $region56
      $region55: #{solubility_forward.2} parent=51 // pred_region
        _
      $region56: #{solubility_forward.2} parent=51 // pred_fallthru
        _
    $region52: #{solubility_forward.2} parent=5 // pred_fallthru
      _
    %p641 = scmp.le.s32.totalorder 2, %s14
    // Predicated region
    $region57: #{solubility_forward.2} parent=5 // pred_check
      %p642 = pneg %p641
    $region58: #{solubility_forward.2} parent=5 // pred_check_branch
      %644 = sbr.rel (%p642) target = $region60
    $region59: #{solubility_forward.2} parent=5 // pred_region
      %s645 = ssub.s32 %s14, 2
      // Predicated region
      $region61: #{solubility_forward.2} parent=59 // pred_check
        %p646 = pneg %p221
      $region62: #{solubility_forward.2} parent=59 // pred_check_branch
        %648 = sbr.rel (%p646) target = $region64
      $region63: #{solubility_forward.2} parent=59 // pred_region
        %p649 = scmp.lt.s32.totalorder %s20, 1
        %s650 = scalar_select %p649, %s20, 1
        %s651 = scalar_lea.vmem %s8, %s650
      $region64: #{solubility_forward.2} parent=59 // pred_fallthru
        _
    $region60: #{solubility_forward.2} parent=5 // pred_fallthru
      _
  $region6: #{solubility_forward.2} parent=0 // loop_footer
    %s18 = sadd.s32 1, %s14
  $region7: #{solubility_forward.2} parent=0 // loop_footer_branch
    %13 = sbr.rel target = $region3
  $region8: #{solubility_forward.2} parent=0 // loop_exit
    _

</llo_original>
